<compile_context>
chip_gen: v6e
topology: v6e:2x2x1
jax: 0.10.0
libtpu: 0.0.40
codegen_flags: <defaults>
</compile_context>

<pallas_src>
import functools

import numpy as np
import jax
import jax.numpy as jnp
from jax import lax
from jax.experimental import pallas as pl
from jax.experimental.pallas import tpu as pltpu


_INV_SQRT2 = 0.7071067811865476


def _round_up(v, m):
    return ((v + m - 1) // m) * m


def _pick_tile(n, cap=512):
    """Row-tile: multiple of 128, at most `cap`, no bigger than needed."""
    return max(128, min(cap, _round_up(max(int(n), 1), 128)))


def _pad2d(arr, rows, cols, fill=0):
    r, c = arr.shape
    if r == rows and c == cols:
        return arr
    out = jnp.full((rows, cols), fill, arr.dtype)
    return out.at[:r, :c].set(arr)


# ---------------------------------------------------------------------------
# Kernel 1: fused MLP (all layers in one pallas_call) + fused epilogue
# ---------------------------------------------------------------------------
def _fused_mlp_kernel(x_ref, *refs, n_layers, has_f, has_w):
    """refs = (w0, b0, ..., w_{L-1}, b_{L-1}, [f_edge], [edge_w], o_ref)."""
    o_ref = refs[-1]
    h = x_ref[...].astype(jnp.float32)
    for l in range(n_layers):
        w = refs[2 * l][...]
        b = refs[2 * l + 1][...]
        h = jnp.dot(h, w, preferred_element_type=jnp.float32) + b
        if l < n_layers - 1:
            # exact GELU (PyTorch F.gelu default, approximate='none')
            h = 0.5 * h * (1.0 + lax.erf(h * jnp.float32(_INV_SQRT2)))
    idx = 2 * n_layers
    if has_f:                                 # diagonal k(x,y,f) * f(y)
        h = h * refs[idx][...].astype(jnp.float32)
        idx += 1
    if has_w:                                 # per-edge quadrature weight
        h = h * refs[idx][...].astype(jnp.float32)
    o_ref[...] = h.astype(o_ref.dtype)


def pallas_fused_mlp(x2d, params, f_edge=None, edge_w=None, tr=128):
    """x2d: (M, K0) f32. params: [(W.T (in,out), b (out,))].
    f_edge: optional (M, d_out) diagonal multiplier (fused epilogue).
    edge_w: optional (M,) per-row scalar multiplier (fused epilogue).
    Returns padded (M_pad, N_out_pad) f32; padded cols are zero."""
    M, K0 = x2d.shape
    n_layers = len(params)
    dims = [K0] + [int(b.shape[0]) for (_, b) in params]
    dims_p = [_round_up(d, 128) for d in dims]          # lane-dense feature dims
    M_pad = _round_up(max(M, 1), tr)
    N_out = dims_p[-1]

    flat_inputs = [_pad2d(x2d.astype(jnp.float32), M_pad, dims_p[0])]
    in_specs = [pl.BlockSpec((tr, dims_p[0]), lambda i: (i, 0))]
    for l, (w_t, b) in enumerate(params):
        Kp, Np = dims_p[l], dims_p[l + 1]
        flat_inputs.append(_pad2d(w_t.astype(jnp.float32), Kp, Np))
        flat_inputs.append(_pad2d(b.reshape(1, -1).astype(jnp.float32), 1, Np))
        in_specs.append(pl.BlockSpec((Kp, Np), lambda i: (0, 0)))   # weight resident
        in_specs.append(pl.BlockSpec((1, Np), lambda i: (0, 0)))    # bias resident

    has_f = f_edge is not None
    has_w = edge_w is not None
    if has_f:
        flat_inputs.append(_pad2d(f_edge.astype(jnp.float32), M_pad, N_out))
        in_specs.append(pl.BlockSpec((tr, N_out), lambda i: (i, 0)))
    if has_w:
        flat_inputs.append(
            _pad2d(edge_w.reshape(-1, 1).astype(jnp.float32), M_pad, 1))
        in_specs.append(pl.BlockSpec((tr, 1), lambda i: (i, 0)))

    kernel = functools.partial(_fused_mlp_kernel, n_layers=n_layers,
                               has_f=has_f, has_w=has_w)

    flops = 2 * M_pad * sum(dims_p[l] * dims_p[l + 1] for l in range(n_layers))
    transcendentals = M_pad * sum(dims_p[1:-1])
    bytes_accessed = 4 * (M_pad * (dims_p[0] + N_out)
                          + sum(dims_p[l] * dims_p[l + 1] + dims_p[l + 1]
                                for l in range(n_layers))
                          + (M_pad * N_out if has_f else 0)
                          + (M_pad if has_w else 0))

    w_bytes = 4 * sum(dims_p[l] * dims_p[l + 1] + dims_p[l + 1]
                      for l in range(n_layers))
    tile_bytes = 4 * 2 * tr * (dims_p[0] + N_out
                               + (N_out if has_f else 0) + (1 if has_w else 0))
    tmp_bytes = 4 * 4 * tr * max(dims_p)
    vmem_limit = int(min(max(2 * w_bytes + tile_bytes + tmp_bytes + (4 << 20),
                             32 << 20), 64 << 20))

    return pl.pallas_call(
        kernel,
        out_shape=jax.ShapeDtypeStruct((M_pad, N_out), jnp.float32),
        grid_spec=pltpu.PrefetchScalarGridSpec(
            num_scalar_prefetch=0,
            grid=(M_pad // tr,),
            in_specs=in_specs,
            out_specs=pl.BlockSpec((tr, N_out), lambda i: (i, 0)),
        ),
        compiler_params=pltpu.CompilerParams(
            dimension_semantics=("parallel",),
            vmem_limit_bytes=vmem_limit),
        cost_estimate=pl.CostEstimate(flops=int(flops),
                                      transcendentals=int(transcendentals),
                                      bytes_accessed=int(bytes_accessed)),
    )(*flat_inputs)


# ---------------------------------------------------------------------------
# Kernel 2: segment-CSR reduce (one-hot matmul on MXU, edge axis tiled)
# ---------------------------------------------------------------------------
def _segment_reduce_kernel(seg_ref, scale_ref, src_ref, *rest, has_f):
    if has_f:
        f_ref, o_ref, acc_ref = rest
    else:
        o_ref, acc_ref = rest
    j = pl.program_id(2)

    @pl.when(j == 0)
    def _():
        acc_ref[...] = jnp.zeros_like(acc_ref)

    tm = acc_ref.shape[0]
    rows = pl.program_id(1) * tm + lax.broadcasted_iota(jnp.int32, (tm, 1), 0)
    onehot = (seg_ref[...] == rows).astype(jnp.float32)          # (tm, tr)
    s = src_ref[...].astype(jnp.float32)                         # (tr, Dp)
    if has_f:
        s = s * f_ref[0].astype(jnp.float32)                     # batched f(y) mult
    acc_ref[...] += jnp.dot(onehot, s, preferred_element_type=jnp.float32)

    @pl.when(j == pl.num_programs(2) - 1)
    def _():
        o_ref[0] = (acc_ref[...] * scale_ref[...]).astype(o_ref.dtype)


def pallas_segment_reduce(src_pad, seg_ids, num_segments, seg_scale, d_out,
                          batch=1, src_batched=False, f_edge=None,
                          tr=128, tm=128):
    """src_pad: (Rs, Dp) pre-padded MLP output (Rs = Ep or batch*Ep).
    seg_ids: (E,) segment id per edge (same for all batches).
    seg_scale: (num_segments,) per-segment post-multiplier (1/|A(x)| or 1).
    f_edge: optional (batch, E, d_out) multiplier fused before the reduce.
    Returns (batch, num_segments, d_out) f32."""
    Rs, Dp = src_pad.shape
    Ep = Rs // batch if src_batched else Rs
    nEb = Ep // tr
    E = int(seg_ids.shape[0])
    Mp = _round_up(max(num_segments, 1), tm)

    seg_p = jnp.full((1, Ep), -1, jnp.int32).at[0, :E].set(
        seg_ids.astype(jnp.int32))
    scale_p = jnp.zeros((Mp, 1), jnp.float32).at[:num_segments, 0].set(
        seg_scale.astype(jnp.float32))

    has_f = f_edge is not None
    src_stride = nEb if src_batched else 0
    inputs = [seg_p, scale_p, src_pad]
    in_specs = [pl.BlockSpec((1, tr), lambda b, i, j: (0, j)),
                pl.BlockSpec((tm, 1), lambda b, i, j: (i, 0)),
                pl.BlockSpec((tr, Dp), lambda b, i, j: (b * src_stride + j, 0))]
    if has_f:
        f_p = jnp.zeros((batch, Ep, Dp), jnp.float32).at[:, :E, :d_out].set(
            f_edge.astype(jnp.float32))
        inputs.append(f_p)
        in_specs.append(pl.BlockSpec((1, tr, Dp), lambda b, i, j: (b, j, 0)))

    kernel = functools.partial(_segment_reduce_kernel, has_f=has_f)
    flops = 2 * batch * Mp * Ep * Dp
    bytes_accessed = 4 * (batch * Mp * Dp + (batch if src_batched else 1) * Ep * Dp
                          + (batch * Ep * Dp if has_f else 0) + Ep)

    out = pl.pallas_call(
        kernel,
        out_shape=jax.ShapeDtypeStruct((batch, Mp, Dp), jnp.float32),
        grid_spec=pltpu.PrefetchScalarGridSpec(
            num_scalar_prefetch=0,
            grid=(batch, Mp // tm, nEb),
            in_specs=in_specs,
            out_specs=pl.BlockSpec((1, tm, Dp), lambda b, i, j: (b, i, 0)),
            scratch_shapes=[pltpu.VMEM((tm, Dp), jnp.float32)],
        ),
        compiler_params=pltpu.CompilerParams(
            dimension_semantics=("parallel", "parallel", "arbitrary")),
        cost_estimate=pl.CostEstimate(flops=int(flops), transcendentals=0,
                                      bytes_accessed=int(bytes_accessed)),
    )(*inputs)
    return out[:, :num_segments, :d_out]


# ---------------------------------------------------------------------------
# IntegralTransform forward (wrapper around the two Pallas kernels)
# ---------------------------------------------------------------------------
def integral_transform_forward(y, neighbors, params, x=None, f_y=None,
                               weights=None, transform_type="linear"):
    """Equivalent of IntegralTransform.forward with mlp=MLPLinear(params)."""
    nbr_index = neighbors["neighbors_index"]          # (E,) int32
    splits = neighbors["neighbors_row_splits"]        # (m+1,) int32
    if x is None:
        x = y
    E = int(nbr_index.shape[0])
    m = int(splits.shape[0]) - 1
    d_out = int(params[-1][1].shape[0])

    # segment id of each edge == index used by repeat_interleave(x, num_reps)
    seg_ids = (jnp.searchsorted(splits, jnp.arange(E, dtype=splits.dtype),
                                side="right") - 1).astype(jnp.int32)

    # TODO(synk): data-dependent gathers stay in XLA take (a Pallas gather would
    # force 1-row tiles and starve the MXU here).
    rep_features = jnp.take(y, nbr_index, axis=0)      # (E, d1)
    self_features = jnp.take(x, seg_ids, axis=0)       # (E, d2) == repeat_interleave
    agg = jnp.concatenate([rep_features, self_features], axis=-1)

    batched = f_y is not None and f_y.ndim == 3
    B = int(f_y.shape[0]) if batched else 1
    nonlinear = transform_type in ("nonlinear", "nonlinear_kernelonly")
    diag = f_y is not None and transform_type != "nonlinear_kernelonly"

    in_features = None
    in_features_mul = None
    if f_y is not None:
        in_features = jnp.take(f_y, nbr_index, axis=1 if batched else 0)
        if diag:
            d3 = int(in_features.shape[-1])
            if d3 == 1 and d_out > 1:
                in_features_mul = jnp.broadcast_to(
                    in_features, in_features.shape[:-1] + (d_out,))
            else:
                assert d3 == d_out, \
                    "diagonal kernel requires f(y) channels == MLP output channels"
                in_features_mul = in_features

    edge_w = jnp.take(weights, nbr_index, axis=0) if weights is not None else None

    tr = _pick_tile(E)        # edge-row tile (shared by both kernels)
    tm = _pick_tile(m)        # output-segment tile
    Ep = _round_up(max(E, 1), tr)

    if batched and nonlinear:
        # kernel input depends on f(y): rows are (batch * edge), padded per batch
        agg_b = jnp.concatenate(
            [jnp.broadcast_to(agg[None], (B,) + agg.shape), in_features], axis=-1)
        K0 = agg_b.shape[-1]
        x_rows = jnp.zeros((B, Ep, K0), jnp.float32).at[:, :E, :].set(
            agg_b).reshape(B * Ep, K0)
        f_rows = None
        if diag:
            f_rows = jnp.zeros((B, Ep, d_out), jnp.float32).at[:, :E, :].set(
                in_features_mul).reshape(B * Ep, d_out)
        w_rows = None
        if edge_w is not None:
            w_rows = jnp.zeros((B, Ep), jnp.float32).at[:, :E].set(
                jnp.broadcast_to(edge_w, (B, E))).reshape(B * Ep)
        k_src = pallas_fused_mlp(x_rows, params, f_edge=f_rows, edge_w=w_rows, tr=tr)
        src_batched = True
        f_for_reduce = None
    else:
        agg_in = agg
        if nonlinear and f_y is not None:          # unbatched nonlinear: concat f(y)
            agg_in = jnp.concatenate([agg, in_features], axis=-1)
        x_rows = jnp.zeros((Ep, agg_in.shape[-1]), jnp.float32).at[:E, :].set(agg_in)
        f_rows = None
        if diag and not batched:                   # fuse k*f(y) into the MLP epilogue
            f_rows = jnp.zeros((Ep, d_out), jnp.float32).at[:E, :].set(in_features_mul)
        w_rows = None
        if edge_w is not None:                     # fuse quadrature weights
            w_rows = jnp.zeros((Ep,), jnp.float32).at[:E].set(edge_w)
        k_src = pallas_fused_mlp(x_rows, params, f_edge=f_rows, edge_w=w_rows, tr=tr)
        src_batched = False
        # batched-linear: shared k(x,y) multiplied by per-batch f(y) inside the reduce
        f_for_reduce = in_features_mul if (diag and batched) else None

    counts = (splits[1:] - splits[:-1]).astype(jnp.float32)
    if weights is not None:
        seg_scale = jnp.ones((m,), jnp.float32)            # weighted sum
    else:
        seg_scale = 1.0 / jnp.maximum(counts, 1.0)         # mean = sum / |A(x)|

    out = pallas_segment_reduce(k_src, seg_ids, m, seg_scale, d_out,
                                batch=B if batched else 1,
                                src_batched=src_batched,
                                f_edge=f_for_reduce, tr=tr, tm=tm)
    return out if batched else out[0]


# ---------------------------------------------------------------------------
# MLP parameter init (nn.Linear-like), stored as (W.T, b)
# ---------------------------------------------------------------------------
def init_mlp_params(key, layers):
    params = []
    for j in range(len(layers) - 1):
        fan_in, fan_out = layers[j], layers[j + 1]
        key, kw, kb = jax.random.split(key, 3)
        bound = 1.0 / jnp.sqrt(fan_in)
        w = jax.random.uniform(kw, (fan_out, fan_in), jnp.float32, -bound, bound)
        b = jax.random.uniform(kb, (fan_out,), jnp.float32, -bound, bound)
        params.append((w.T, b))
    return params


# ---------------------------------------------------------------------------
# Pure-JAX reference (mirrors the PyTorch module, sum-then-divide mean)
# ---------------------------------------------------------------------------
def _reference_segment_csr(src, splits, reduce):
    splits = np.asarray(splits)
    m = splits.shape[-1] - 1
    out = jnp.zeros(src.shape[:-2] + (m, src.shape[-1]), src.dtype)
    for i in range(m):
        s, e = int(splits[i]), int(splits[i + 1])
        if e > s:
            seg = src[..., s:e, :].sum(axis=-2)
            if reduce == "mean":
                seg = seg / (e - s)
            out = out.at[..., i, :].add(seg)
    return out


def reference_forward(y, nbr_index, splits, params, x=None, f_y=None,
                      weights=None, transform_type="linear"):
    if x is None:
        x = y
    nbr = np.asarray(nbr_index)
    counts = np.asarray(splits[1:] - splits[:-1])
    rep = y[nbr]
    self_feat = jnp.asarray(np.repeat(np.asarray(x), counts, axis=0))
    agg = jnp.concatenate([rep, self_feat], axis=-1)

    batched = f_y is not None and f_y.ndim == 3
    in_features = None
    if f_y is not None:
        in_features = f_y[:, nbr, :] if batched else f_y[nbr]
    if f_y is not None and transform_type in ("nonlinear", "nonlinear_kernelonly"):
        if batched:
            agg = jnp.broadcast_to(agg[None], (f_y.shape[0],) + agg.shape)
        agg = jnp.concatenate([agg, in_features], axis=-1)

    h = agg
    for i, (w_t, b) in enumerate(params):
        h = jnp.dot(h, w_t, precision=jax.lax.Precision.HIGHEST) + b
        if i < len(params) - 1:
            h = 0.5 * h * (1.0 + lax.erf(h * jnp.float32(_INV_SQRT2)))

    if f_y is not None and transform_type != "nonlinear_kernelonly":
        h = h * in_features
    if weights is not None:
        nw = weights[nbr]
        h = nw[..., None] * h
        red = "sum"
    else:
        red = "mean"
    return _reference_segment_csr(h, splits, red)


# ---------------------------------------------------------------------------
if __name__ == "__main__":
    key = jax.random.PRNGKey(0)
    k1, k2, k3, k4, k5, k6, k7, kp1, kp2 = jax.random.split(key, 9)

    n, m_pts = 24, 10          # n source points, m output points
    d_pt, d_f = 3, 8           # point dim, f(y) channel dim

    y = jax.random.normal(k1, (n, d_pt), jnp.float32)
    x = jax.random.normal(k2, (m_pts, d_pt), jnp.float32)

    # deterministic CSR neighborhoods: 1..5 neighbors per output point
    counts = jax.random.randint(k3, (m_pts,), 1, 6).astype(jnp.int32)
    splits = jnp.concatenate([jnp.zeros((1,), jnp.int32),
                              jnp.cumsum(counts)]).astype(jnp.int32)
    E = int(splits[-1])
    nbr_index = jax.random.randint(k4, (E,), 0, n).astype(jnp.int32)
    neighbors = {"neighbors_index": nbr_index, "neighbors_row_splits": splits}

    f_y = jax.random.normal(k5, (n, d_f), jnp.float32)
    f_y_batched = jax.random.normal(k7, (2, n, d_f), jnp.float32)
    weights = jax.random.uniform(k6, (n,), jnp.float32, 0.1, 1.0)

    # kernel MLPs: nonlinear -> input dim d_pt+d_pt+d_f, linear -> d_pt+d_pt
    params_nonlin = init_mlp_params(kp1, [2 * d_pt + d_f, 32, d_f])
    params_lin = init_mlp_params(kp2, [2 * d_pt, 32, d_f])

    # ---- config 1: transform (d) 'nonlinear', un-batched f_y, mean reduction ----
    out1 = jax.block_until_ready(integral_transform_forward(
        y, neighbors, params_nonlin, x=x, f_y=f_y, transform_type="nonlinear"))
    ref1 = reference_forward(y, nbr_index, splits, params_nonlin, x=x, f_y=f_y,
                             transform_type="nonlinear")
    assert out1.shape == (m_pts, d_f)
    assert jnp.allclose(out1, ref1, atol=1e-3, rtol=1e-3)

    # ---- config 2: transform (b) 'linear', batched f_y, weighted sum reduction ----
    out2 = jax.block_until_ready(integral_transform_forward(
        y, neighbors, params_lin, x=x, f_y=f_y_batched, weights=weights,
        transform_type="linear"))
    ref2 = reference_forward(y, nbr_index, splits, params_lin, x=x,
                             f_y=f_y_batched, weights=weights,
                             transform_type="linear")
    assert out2.shape == (2, m_pts, d_f)
    assert jnp.allclose(out2, ref2, atol=1e-3, rtol=1e-3)

    # ---- config 3: transform (d) 'nonlinear', batched f_y, mean reduction ----
    out3 = jax.block_until_ready(integral_transform_forward(
        y, neighbors, params_nonlin, x=x, f_y=f_y_batched,
        transform_type="nonlinear"))
    ref3 = reference_forward(y, nbr_index, splits, params_nonlin, x=x,
                             f_y=f_y_batched, transform_type="nonlinear")
    assert out3.shape == (2, m_pts, d_f)
    assert jnp.allclose(out3, ref3, atol=1e-3, rtol=1e-3)

    print("KERNEL_OK")
</pallas_src>

<mosaic_0001>
module attributes {stable_mosaic.version = 11 : i64} {
  func.func @_fused_mlp_kernel(%arg0: i32, %arg1: memref<128x128xf32, #tpu.memory_space<vmem>>, %arg2: memref<128x128xf32, #tpu.memory_space<vmem>>, %arg3: memref<1x128xf32, #tpu.memory_space<vmem>>, %arg4: memref<128x128xf32, #tpu.memory_space<vmem>>, %arg5: memref<1x128xf32, #tpu.memory_space<vmem>>, %arg6: memref<128x128xf32, #tpu.memory_space<vmem>>, %arg7: memref<128x128xf32, #tpu.memory_space<vmem>>) attributes {dimension_semantics = [#tpu.dimension_semantics<parallel>], iteration_bounds = array<i64: 1>, scalar_prefetch = 0 : i64, scratch_operands = 0 : i64, tpu.core_type = #tpu.core_type<tc>, window_params = [{transform_indices = @transform_0, window_bounds = array<i64: 128, 128>}, {pipeline_mode = #tpu.pipeline_mode<synchronous>, transform_indices = @transform_1, window_bounds = array<i64: 128, 128>}, {pipeline_mode = #tpu.pipeline_mode<synchronous>, transform_indices = @transform_2, window_bounds = array<i64: 1, 128>}, {pipeline_mode = #tpu.pipeline_mode<synchronous>, transform_indices = @transform_3, window_bounds = array<i64: 128, 128>}, {pipeline_mode = #tpu.pipeline_mode<synchronous>, transform_indices = @transform_4, window_bounds = array<i64: 1, 128>}, {transform_indices = @transform_5, window_bounds = array<i64: 128, 128>}, {transform_indices = @transform_6, window_bounds = array<i64: 128, 128>}]} {
    %c0 = arith.constant 0 : index
    %c0_0 = arith.constant 0 : index
    %0 = vector.load %arg1[%c0, %c0_0] : memref<128x128xf32, #tpu.memory_space<vmem>>, vector<128x128xf32>
    %c0_1 = arith.constant 0 : index
    %c0_2 = arith.constant 0 : index
    %1 = vector.load %arg2[%c0_1, %c0_2] : memref<128x128xf32, #tpu.memory_space<vmem>>, vector<128x128xf32>
    %c0_3 = arith.constant 0 : index
    %c0_4 = arith.constant 0 : index
    %2 = vector.load %arg3[%c0_3, %c0_4] : memref<1x128xf32, #tpu.memory_space<vmem>>, vector<1x128xf32>
    %cst = arith.constant dense<0.000000e+00> : vector<128x128xf32>
    %3 = tpu.matmul %0, %1, %cst {dimension_numbers = #tpu.dot_dimension_numbers<[1], [0], [0], [1], [0, 0, 1, 1], [], []>} : vector<128x128xf32>, vector<128x128xf32>, vector<128x128xf32> -> vector<128x128xf32>
    %4 = vector.broadcast %2 : vector<1x128xf32> to vector<128x128xf32>
    %5 = arith.addf %3, %4 : vector<128x128xf32>
    %cst_5 = arith.constant 5.000000e-01 : f32
    %6 = vector.broadcast %cst_5 : f32 to vector<128x128xf32>
    %7 = arith.mulf %6, %5 : vector<128x128xf32>
    %cst_6 = arith.constant 0.707106769 : f32
    %8 = vector.broadcast %cst_6 : f32 to vector<128x128xf32>
    %9 = arith.mulf %5, %8 : vector<128x128xf32>
    %10 = math.erf %9 : vector<128x128xf32>
    %cst_7 = arith.constant 1.000000e+00 : f32
    %11 = vector.broadcast %cst_7 : f32 to vector<128x128xf32>
    %12 = arith.addf %11, %10 : vector<128x128xf32>
    %13 = arith.mulf %7, %12 : vector<128x128xf32>
    %c0_8 = arith.constant 0 : index
    %c0_9 = arith.constant 0 : index
    %14 = vector.load %arg4[%c0_8, %c0_9] : memref<128x128xf32, #tpu.memory_space<vmem>>, vector<128x128xf32>
    %c0_10 = arith.constant 0 : index
    %c0_11 = arith.constant 0 : index
    %15 = vector.load %arg5[%c0_10, %c0_11] : memref<1x128xf32, #tpu.memory_space<vmem>>, vector<1x128xf32>
    %cst_12 = arith.constant dense<0.000000e+00> : vector<128x128xf32>
    %16 = tpu.matmul %13, %14, %cst_12 {dimension_numbers = #tpu.dot_dimension_numbers<[1], [0], [0], [1], [0, 0, 1, 1], [], []>} : vector<128x128xf32>, vector<128x128xf32>, vector<128x128xf32> -> vector<128x128xf32>
    %17 = vector.broadcast %15 : vector<1x128xf32> to vector<128x128xf32>
    %18 = arith.addf %16, %17 : vector<128x128xf32>
    %c0_13 = arith.constant 0 : index
    %c0_14 = arith.constant 0 : index
    %19 = vector.load %arg6[%c0_13, %c0_14] : memref<128x128xf32, #tpu.memory_space<vmem>>, vector<128x128xf32>
    %20 = arith.mulf %18, %19 : vector<128x128xf32>
    %c0_15 = arith.constant 0 : index
    %c0_16 = arith.constant 0 : index
    %21 = vector.load %arg7[%c0_15, %c0_16] : memref<128x128xf32, #tpu.memory_space<vmem>>, vector<128x128xf32>
    tpu.vector_store %arg7[%c0_15, %c0_16], %20 {strides = array<i32>} : memref<128x128xf32, #tpu.memory_space<vmem>>, vector<128x128xf32>,
    return
  }
  func.func @transform_0(%arg0: i32) -> (i32, i32) {
    %c0_i32 = arith.constant 0 : i32
    %c0_i32_0 = arith.constant 0 : i32
    return %arg0, %c0_i32 : i32, i32
  }
  func.func @transform_1(%arg0: i32) -> (i32, i32) {
    %c0_i32 = arith.constant 0 : i32
    %c0_i32_0 = arith.constant 0 : i32
    %c0_i32_1 = arith.constant 0 : i32
    return %c0_i32, %c0_i32_0 : i32, i32
  }
  func.func @transform_2(%arg0: i32) -> (i32, i32) {
    %c0_i32 = arith.constant 0 : i32
    %c0_i32_0 = arith.constant 0 : i32
    %c0_i32_1 = arith.constant 0 : i32
    return %c0_i32, %c0_i32_0 : i32, i32
  }
  func.func @transform_3(%arg0: i32) -> (i32, i32) {
    %c0_i32 = arith.constant 0 : i32
    %c0_i32_0 = arith.constant 0 : i32
    %c0_i32_1 = arith.constant 0 : i32
    return %c0_i32, %c0_i32_0 : i32, i32
  }
  func.func @transform_4(%arg0: i32) -> (i32, i32) {
    %c0_i32 = arith.constant 0 : i32
    %c0_i32_0 = arith.constant 0 : i32
    %c0_i32_1 = arith.constant 0 : i32
    return %c0_i32, %c0_i32_0 : i32, i32
  }
  func.func @transform_5(%arg0: i32) -> (i32, i32) {
    %c0_i32 = arith.constant 0 : i32
    %c0_i32_0 = arith.constant 0 : i32
    return %arg0, %c0_i32 : i32, i32
  }
  func.func @transform_6(%arg0: i32) -> (i32, i32) {
    %c0_i32 = arith.constant 0 : i32
    %c0_i32_0 = arith.constant 0 : i32
    return %arg0, %c0_i32 : i32, i32
  }
}

</mosaic_0001>

<llo_original>
// kernel: tpu_custom_call.1
$region0: #{tpu_custom_call.1}
  #allocation0 [shape = 'u32[]', space=smem, size = 0x4, offset = 0x4, fixed_abs, tag = 'smem constant byte address 0x4 - core index']
  #allocation1 [shape = 'u32[144,128]{1,0:T(1,128)}', space=vmem, size = 0x12000, scoped, tag = 'internal scratch']
  %s0 = inlined_call_operand.hbm [shape: f32[128,128], index: 0, kind: input, shape index: {}]
  %s1 = inlined_call_operand.hbm [shape: f32[128,128], index: 1, kind: input, shape index: {}]
  %s2 = inlined_call_operand.vmem [shape: f32[1,128], index: 2, kind: input, shape index: {}]
  %s3 = inlined_call_operand.hbm [shape: f32[128,128], index: 3, kind: input, shape index: {}]
  %s4 = inlined_call_operand.vmem [shape: f32[1,128], index: 4, kind: input, shape index: {}]
  %s5 = inlined_call_operand.hbm [shape: f32[128,128], index: 5, kind: input, shape index: {}]
  %s6 = inlined_call_operand.hbm [shape: f32[128,128], index: 6, kind: output, shape index: {}]
  %s7 = sld [smem:[#allocation0]]
  $region50: #{tpu_custom_call.1} parent=0
    _
  %s9 = ssub.s32 1, %s7
  %s10 = scalar_select 0, %s9, %s7
  $region1: #{tpu_custom_call.1} parent=0
    #allocation2 [shape = 'u8[65536]{0}', space=vmem, size = 0x10000, scoped, tag = 'input window, operand 0, single buffered']
    #allocation3 [shape = 's32[1]{0}', space=sflag, size = 0x4, scoped, tag = 'scoped memory for tpu_custom_call.1']
    #allocation4 [shape = 's32[1]{0}', space=sflag, size = 0x4, scoped, tag = 'scoped memory for tpu_custom_call.1']
    #allocation5 [shape = 'u8[65536]{0}', space=vmem, size = 0x10000, scoped, tag = 'input window, operand 1, single buffered']
    #allocation6 [shape = 's32[1]{0}', space=sflag, size = 0x4, scoped, tag = 'scoped memory for tpu_custom_call.1']
    #allocation7 [shape = 'u8[65536]{0}', space=vmem, size = 0x10000, scoped, tag = 'input window, operand 3, single buffered']
    #allocation8 [shape = 'u8[65536]{0}', space=vmem, size = 0x10000, scoped, tag = 'input window, operand 5, single buffered']
    #allocation9 [shape = 's32[1]{0}', space=sflag, size = 0x4, scoped, tag = 'scoped memory for tpu_custom_call.1']
    #allocation10 [shape = 'u8[65536]{0}', space=vmem, size = 0x10000, scoped, tag = 'output window, operand 0, single buffered']
    %11 = vsyncpa [#allocation3], 0
    %12 = vsyncpa [#allocation6], 0
    %13 = vsyncpa [#allocation9], 0
    %14 = vsyncpa [#allocation4], 0
    // Predicated region
    $region2: #{tpu_custom_call.1} parent=1 // pred_check
      _
    $region3: #{tpu_custom_call.1} parent=1 // pred_check_branch
      %16 = sbr.rel (0) target = $region5
    $region4: #{tpu_custom_call.1} parent=1 // pred_region
      %s18 = ssub.s32 2048, 2048
      %19 = vsyncadd [#allocation3], %s18
      %s20 = sshll.u32 [#allocation2], 4
      %s21 = int_to_ptr.vmem [resolvable:$true] %s20
      %26 = dma.hbm_to_vmem [thread:$0]  %s0, 2048, %s21, [#allocation3], 128, 128, 8
    $region5: #{tpu_custom_call.1} parent=1 // pred_fallthru
      _
    // Predicated region
    $region6: #{tpu_custom_call.1} parent=1 // pred_check
      _
    $region7: #{tpu_custom_call.1} parent=1 // pred_check_branch
      %28 = sbr.rel (0) target = $region9
    $region8: #{tpu_custom_call.1} parent=1 // pred_region
      %s30 = ssub.s32 2048, 2048
      %31 = vsyncadd [#allocation6], %s30
      %s32 = sshll.u32 [#allocation5], 4
      %s33 = int_to_ptr.vmem [resolvable:$true] %s32
      %38 = dma.hbm_to_vmem [thread:$0]  %s1, 2048, %s33, [#allocation6], 128, 128, 8
    $region9: #{tpu_custom_call.1} parent=1 // pred_fallthru
      _
    // Predicated region
    $region10: #{tpu_custom_call.1} parent=1 // pred_check
      _
    $region11: #{tpu_custom_call.1} parent=1 // pred_check_branch
      %40 = sbr.rel (0) target = $region13
    $region12: #{tpu_custom_call.1} parent=1 // pred_region
      _
    $region13: #{tpu_custom_call.1} parent=1 // pred_fallthru
      _
    // Predicated region
    $region14: #{tpu_custom_call.1} parent=1 // pred_check
      _
    $region15: #{tpu_custom_call.1} parent=1 // pred_check_branch
      %42 = sbr.rel (0) target = $region17
    $region16: #{tpu_custom_call.1} parent=1 // pred_region
      %s44 = ssub.s32 2048, 2048
      %45 = vsyncadd [#allocation6], %s44
      %s46 = sshll.u32 [#allocation7], 4
      %s47 = int_to_ptr.vmem [resolvable:$true] %s46
      %52 = dma.hbm_to_vmem [thread:$0]  %s3, 2048, %s47, [#allocation6], 128, 128, 8
    $region17: #{tpu_custom_call.1} parent=1 // pred_fallthru
      _
    // Predicated region
    $region18: #{tpu_custom_call.1} parent=1 // pred_check
      _
    $region19: #{tpu_custom_call.1} parent=1 // pred_check_branch
      %54 = sbr.rel (0) target = $region21
    $region20: #{tpu_custom_call.1} parent=1 // pred_region
      _
    $region21: #{tpu_custom_call.1} parent=1 // pred_fallthru
      _
    // Predicated region
    $region22: #{tpu_custom_call.1} parent=1 // pred_check
      _
    $region23: #{tpu_custom_call.1} parent=1 // pred_check_branch
      %56 = sbr.rel (0) target = $region25
    $region24: #{tpu_custom_call.1} parent=1 // pred_region
      %s58 = ssub.s32 2048, 2048
      %59 = vsyncadd [#allocation9], %s58
      %s60 = sshll.u32 [#allocation8], 4
      %s61 = int_to_ptr.vmem [resolvable:$true] %s60
      %66 = dma.hbm_to_vmem [thread:$0]  %s5, 2048, %s61, [#allocation9], 128, 128, 8
    $region25: #{tpu_custom_call.1} parent=1 // pred_fallthru
      _
    // Predicated region
    $region26: #{tpu_custom_call.1} parent=1 // pred_check
      _
    $region27: #{tpu_custom_call.1} parent=1 // pred_check_branch
      %68 = sbr.rel (0) target = $region29
    $region28: #{tpu_custom_call.1} parent=1 // pred_region
      %69 = dma.done [#allocation3], 2048
    $region29: #{tpu_custom_call.1} parent=1 // pred_fallthru
      _
    // Predicated region
    $region30: #{tpu_custom_call.1} parent=1 // pred_check
      _
    $region31: #{tpu_custom_call.1} parent=1 // pred_check_branch
      %71 = sbr.rel (0) target = $region33
    $region32: #{tpu_custom_call.1} parent=1 // pred_region
      %72 = dma.done [#allocation6], 2048
    $region33: #{tpu_custom_call.1} parent=1 // pred_fallthru
      _
    // Predicated region
    $region34: #{tpu_custom_call.1} parent=1 // pred_check
      _
    $region35: #{tpu_custom_call.1} parent=1 // pred_check_branch
      %74 = sbr.rel (0) target = $region37
    $region36: #{tpu_custom_call.1} parent=1 // pred_region
      %75 = dma.done [#allocation6], 2048
    $region37: #{tpu_custom_call.1} parent=1 // pred_fallthru
      _
    // Predicated region
    $region38: #{tpu_custom_call.1} parent=1 // pred_check
      _
    $region39: #{tpu_custom_call.1} parent=1 // pred_check_branch
      %77 = sbr.rel (0) target = $region41
    $region40: #{tpu_custom_call.1} parent=1 // pred_region
      %78 = dma.done [#allocation9], 2048
    $region41: #{tpu_custom_call.1} parent=1 // pred_fallthru
      _
    %v79 = vld [vmem:[#allocation2] sm:$0xff]
    %v80 = vld [vmem:[#allocation2 + $0x8] sm:$0xff]
    %v81 = vld [vmem:[#allocation2 + $0x10] sm:$0xff]
    %v82 = vld [vmem:[#allocation2 + $0x18] sm:$0xff]
    %v83 = vld [vmem:[#allocation2 + $0x20] sm:$0xff]
    %v84 = vld [vmem:[#allocation2 + $0x28] sm:$0xff]
    %v85 = vld [vmem:[#allocation2 + $0x30] sm:$0xff]
    %v86 = vld [vmem:[#allocation2 + $0x38] sm:$0xff]
    %v87 = vld [vmem:[#allocation2 + $0x40] sm:$0xff]
    %v88 = vld [vmem:[#allocation2 + $0x48] sm:$0xff]
    %v89 = vld [vmem:[#allocation2 + $0x50] sm:$0xff]
    %v90 = vld [vmem:[#allocation2 + $0x58] sm:$0xff]
    %v91 = vld [vmem:[#allocation2 + $0x60] sm:$0xff]
    %v92 = vld [vmem:[#allocation2 + $0x68] sm:$0xff]
    %v93 = vld [vmem:[#allocation2 + $0x70] sm:$0xff]
    %v94 = vld [vmem:[#allocation2 + $0x78] sm:$0xff]
    %v95 = vld [vmem:[#allocation5] sm:$0xff]
    %v96 = vld [vmem:[#allocation5 + $0x8] sm:$0xff]
    %v97 = vld [vmem:[#allocation5 + $0x10] sm:$0xff]
    %v98 = vld [vmem:[#allocation5 + $0x18] sm:$0xff]
    %v99 = vld [vmem:[#allocation5 + $0x20] sm:$0xff]
    %v100 = vld [vmem:[#allocation5 + $0x28] sm:$0xff]
    %v101 = vld [vmem:[#allocation5 + $0x30] sm:$0xff]
    %v102 = vld [vmem:[#allocation5 + $0x38] sm:$0xff]
    %v103 = vld [vmem:[#allocation5 + $0x40] sm:$0xff]
    %v104 = vld [vmem:[#allocation5 + $0x48] sm:$0xff]
    %v105 = vld [vmem:[#allocation5 + $0x50] sm:$0xff]
    %v106 = vld [vmem:[#allocation5 + $0x58] sm:$0xff]
    %v107 = vld [vmem:[#allocation5 + $0x60] sm:$0xff]
    %v108 = vld [vmem:[#allocation5 + $0x68] sm:$0xff]
    %v109 = vld [vmem:[#allocation5 + $0x70] sm:$0xff]
    %v110 = vld [vmem:[#allocation5 + $0x78] sm:$0xff]
    %v111 = vld [vmem:[%s2] sm:$0x1]
    %v113 = vlaneseq
    %v114 = vshrl.u32 %v113, 7
    %v115 = vsub.s32 0, %v114
    %v116 = vrot.slane %v111, %v115
    %118 = vmatprep.subr.mxu0 0.0
    %119 = vmatpush1.msra.mxu0 %v110
    %120 = vmatprep.subr.mxu0 0.0
    %121 = vmatpush1.msra.mxu0 %v109
    %122 = vmatprep.subr.mxu0 0.0
    %123 = vmatpush1.msra.mxu0 %v108
    %124 = vmatprep.subr.mxu0 0.0
    %125 = vmatpush1.msra.mxu0 %v107
    %126 = vmatprep.subr.mxu0 0.0
    %127 = vmatpush1.msra.mxu0 %v106
    %128 = vmatprep.subr.mxu0 0.0
    %129 = vmatpush1.msra.mxu0 %v105
    %130 = vmatprep.subr.mxu0 0.0
    %131 = vmatpush1.msra.mxu0 %v104
    %132 = vmatprep.subr.mxu0 0.0
    %133 = vmatpush1.msra.mxu0 %v103
    %134 = vmatprep.subr.mxu0 0.0
    %135 = vmatpush1.msra.mxu0 %v102
    %136 = vmatprep.subr.mxu0 0.0
    %137 = vmatpush1.msra.mxu0 %v101
    %138 = vmatprep.subr.mxu0 0.0
    %139 = vmatpush1.msra.mxu0 %v100
    %140 = vmatprep.subr.mxu0 0.0
    %141 = vmatpush1.msra.mxu0 %v99
    %142 = vmatprep.subr.mxu0 0.0
    %143 = vmatpush1.msra.mxu0 %v98
    %144 = vmatprep.subr.mxu0 0.0
    %145 = vmatpush1.msra.mxu0 %v97
    %146 = vmatprep.subr.mxu0 0.0
    %147 = vmatpush1.msra.mxu0 %v96
    %148 = vmatprep.subr.mxu0 0.0
    %149 = vmatpush1.msra.mxu0 %v95
    %150 = vmatprep.subr.mxu0 0.0
    %151 = vmatpush2.msra.mxu0 0.0
    %152 = vmatprep.subr.mxu0 0.0
    %153 = vmatpush2.msra.mxu0 0.0
    %154 = vmatprep.subr.mxu0 0.0
    %155 = vmatpush2.msra.mxu0 0.0
    %156 = vmatprep.subr.mxu0 0.0
    %157 = vmatpush2.msra.mxu0 0.0
    %158 = vmatprep.subr.mxu0 0.0
    %159 = vmatpush2.msra.mxu0 0.0
    %160 = vmatprep.subr.mxu0 0.0
    %161 = vmatpush2.msra.mxu0 0.0
    %162 = vmatprep.subr.mxu0 0.0
    %163 = vmatpush2.msra.mxu0 0.0
    %164 = vmatprep.subr.mxu0 0.0
    %165 = vmatpush2.msra.mxu0 0.0
    %166 = vmatprep.subr.mxu0 0.0
    %167 = vmatpush2.msra.mxu0 0.0
    %168 = vmatprep.subr.mxu0 0.0
    %169 = vmatpush2.msra.mxu0 0.0
    %170 = vmatprep.subr.mxu0 0.0
    %171 = vmatpush2.msra.mxu0 0.0
    %172 = vmatprep.subr.mxu0 0.0
    %173 = vmatpush2.msra.mxu0 0.0
    %174 = vmatprep.subr.mxu0 0.0
    %175 = vmatpush2.msra.mxu0 0.0
    %176 = vmatprep.subr.mxu0 0.0
    %177 = vmatpush2.msra.mxu0 0.0
    %178 = vmatprep.subr.mxu0 0.0
    %179 = vmatpush2.msra.mxu0 0.0
    %180 = vmatprep.subr.mxu0 0.0
    %181 = vmatpush2.msra.mxu0 0.0
    %182 = vmatprep.mubr.f32.mxu0 0.0
    %183 = vmatmul.mubr.f32.gmra.mxu0 %v79
    %v184 = vpop.f32.mrf.mxu0
    %v185 = vadd.f32 %v116, %v184
    %v186 = vpop.f32.mrf.mxu0
    %187 = vmatprep.mubr.f32.mxu0 0.0
    %188 = vmatmul.mubr.f32.gmra.mxu0 %v80
    %v189 = vpop.f32.mrf.mxu0
    %v190 = vadd.f32 %v116, %v189
    %v191 = vpop.f32.mrf.mxu0
    %192 = vmatprep.mubr.f32.mxu0 0.0
    %193 = vmatmul.mubr.f32.gmra.mxu0 %v81
    %v194 = vpop.f32.mrf.mxu0
    %v195 = vadd.f32 %v116, %v194
    %v196 = vpop.f32.mrf.mxu0
    %197 = vmatprep.mubr.f32.mxu0 0.0
    %198 = vmatmul.mubr.f32.gmra.mxu0 %v82
    %v199 = vpop.f32.mrf.mxu0
    %v200 = vadd.f32 %v116, %v199
    %v201 = vpop.f32.mrf.mxu0
    %202 = vmatprep.mubr.f32.mxu0 0.0
    %203 = vmatmul.mubr.f32.gmra.mxu0 %v83
    %v204 = vpop.f32.mrf.mxu0
    %v205 = vadd.f32 %v116, %v204
    %v206 = vpop.f32.mrf.mxu0
    %207 = vmatprep.mubr.f32.mxu0 0.0
    %208 = vmatmul.mubr.f32.gmra.mxu0 %v84
    %v209 = vpop.f32.mrf.mxu0
    %v210 = vadd.f32 %v116, %v209
    %v211 = vpop.f32.mrf.mxu0
    %212 = vmatprep.mubr.f32.mxu0 0.0
    %213 = vmatmul.mubr.f32.gmra.mxu0 %v85
    %v214 = vpop.f32.mrf.mxu0
    %v215 = vadd.f32 %v116, %v214
    %v216 = vpop.f32.mrf.mxu0
    %217 = vmatprep.mubr.f32.mxu0 0.0
    %218 = vmatmul.mubr.f32.gmra.mxu0 %v86
    %v219 = vpop.f32.mrf.mxu0
    %v220 = vadd.f32 %v116, %v219
    %v221 = vpop.f32.mrf.mxu0
    %222 = vmatprep.mubr.f32.mxu0 0.0
    %223 = vmatmul.mubr.f32.gmra.mxu0 %v87
    %v224 = vpop.f32.mrf.mxu0
    %v225 = vadd.f32 %v116, %v224
    %v226 = vpop.f32.mrf.mxu0
    %227 = vmatprep.mubr.f32.mxu0 0.0
    %228 = vmatmul.mubr.f32.gmra.mxu0 %v88
    %v229 = vpop.f32.mrf.mxu0
    %v230 = vadd.f32 %v116, %v229
    %v231 = vpop.f32.mrf.mxu0
    %232 = vmatprep.mubr.f32.mxu0 0.0
    %233 = vmatmul.mubr.f32.gmra.mxu0 %v89
    %v234 = vpop.f32.mrf.mxu0
    %v235 = vadd.f32 %v116, %v234
    %v236 = vpop.f32.mrf.mxu0
    %237 = vmatprep.mubr.f32.mxu0 0.0
    %238 = vmatmul.mubr.f32.gmra.mxu0 %v90
    %v239 = vpop.f32.mrf.mxu0
    %v240 = vadd.f32 %v116, %v239
    %v241 = vpop.f32.mrf.mxu0
    %242 = vmatprep.mubr.f32.mxu0 0.0
    %243 = vmatmul.mubr.f32.gmra.mxu0 %v91
    %v244 = vpop.f32.mrf.mxu0
    %v245 = vadd.f32 %v116, %v244
    %v246 = vpop.f32.mrf.mxu0
    %247 = vmatprep.mubr.f32.mxu0 0.0
    %248 = vmatmul.mubr.f32.gmra.mxu0 %v92
    %v249 = vpop.f32.mrf.mxu0
    %v250 = vadd.f32 %v116, %v249
    %v251 = vpop.f32.mrf.mxu0
    %252 = vmatprep.mubr.f32.mxu0 0.0
    %253 = vmatmul.mubr.f32.gmra.mxu0 %v93
    %v254 = vpop.f32.mrf.mxu0
    %v255 = vadd.f32 %v116, %v254
    %v256 = vpop.f32.mrf.mxu0
    %257 = vmatprep.mubr.f32.mxu0 0.0
    %258 = vmatmul.mubr.f32.gmra.mxu0 %v94
    %v259 = vpop.f32.mrf.mxu0
    %v260 = vadd.f32 %v116, %v259
    %v261 = vpop.f32.mrf.mxu0
    %262 = vdwg.mxu0
    %v263 = vmul.f32 %v185, 0.5
    %v264 = vmul.f32 %v190, 0.5
    %v265 = vmul.f32 %v195, 0.5
    %v266 = vmul.f32 %v200, 0.5
    %v267 = vmul.f32 %v205, 0.5
    %v268 = vmul.f32 %v210, 0.5
    %v269 = vmul.f32 %v215, 0.5
    %v270 = vmul.f32 %v220, 0.5
    %v271 = vmul.f32 %v225, 0.5
    %v272 = vmul.f32 %v230, 0.5
    %v273 = vmul.f32 %v235, 0.5
    %v274 = vmul.f32 %v240, 0.5
    %v275 = vmul.f32 %v245, 0.5
    %v276 = vmul.f32 %v250, 0.5
    %v277 = vmul.f32 %v255, 0.5
    %v278 = vmul.f32 %v260, 0.5
    %v279 = vmul.f32 %v185, 0.70710677
    %v280 = vmul.f32 %v190, 0.70710677
    %v281 = vmul.f32 %v195, 0.70710677
    %v282 = vmul.f32 %v200, 0.70710677
    %v283 = vmul.f32 %v205, 0.70710677
    %v284 = vmul.f32 %v210, 0.70710677
    %v285 = vmul.f32 %v215, 0.70710677
    %v286 = vmul.f32 %v220, 0.70710677
    %v287 = vmul.f32 %v225, 0.70710677
    %v288 = vmul.f32 %v230, 0.70710677
    %v289 = vmul.f32 %v235, 0.70710677
    %v290 = vmul.f32 %v240, 0.70710677
    %v291 = vmul.f32 %v245, 0.70710677
    %v292 = vmul.f32 %v250, 0.70710677
    %v293 = vmul.f32 %v255, 0.70710677
    %v294 = vmul.f32 %v260, 0.70710677
    %v295 = verf.f32.pop %v279
    %v296 = verf.f32.pop %v280
    %v297 = verf.f32.pop %v281
    %v298 = verf.f32.pop %v282
    %v299 = verf.f32.pop %v283
    %v300 = verf.f32.pop %v284
    %v301 = verf.f32.pop %v285
    %v302 = verf.f32.pop %v286
    %v303 = verf.f32.pop %v287
    %v304 = verf.f32.pop %v288
    %v305 = verf.f32.pop %v289
    %v306 = verf.f32.pop %v290
    %v307 = verf.f32.pop %v291
    %v308 = verf.f32.pop %v292
    %v309 = verf.f32.pop %v293
    %v310 = verf.f32.pop %v294
    %v311 = vadd.f32 %v295, 1.0
    %v312 = vadd.f32 %v296, 1.0
    %v313 = vadd.f32 %v297, 1.0
    %v314 = vadd.f32 %v298, 1.0
    %v315 = vadd.f32 %v299, 1.0
    %v316 = vadd.f32 %v300, 1.0
    %v317 = vadd.f32 %v301, 1.0
    %v318 = vadd.f32 %v302, 1.0
    %v319 = vadd.f32 %v303, 1.0
    %v320 = vadd.f32 %v304, 1.0
    %v321 = vadd.f32 %v305, 1.0
    %v322 = vadd.f32 %v306, 1.0
    %v323 = vadd.f32 %v307, 1.0
    %v324 = vadd.f32 %v308, 1.0
    %v325 = vadd.f32 %v309, 1.0
    %v326 = vadd.f32 %v310, 1.0
    %v327 = vmul.f32 %v263, %v311
    %v328 = vmul.f32 %v264, %v312
    %v329 = vmul.f32 %v265, %v313
    %v330 = vmul.f32 %v266, %v314
    %v331 = vmul.f32 %v267, %v315
    %v332 = vmul.f32 %v268, %v316
    %v333 = vmul.f32 %v269, %v317
    %v334 = vmul.f32 %v270, %v318
    %v335 = vmul.f32 %v271, %v319
    %v336 = vmul.f32 %v272, %v320
    %v337 = vmul.f32 %v273, %v321
    %v338 = vmul.f32 %v274, %v322
    %v339 = vmul.f32 %v275, %v323
    %v340 = vmul.f32 %v276, %v324
    %v341 = vmul.f32 %v277, %v325
    %v342 = vmul.f32 %v278, %v326
    %v343 = vld [vmem:[#allocation7] sm:$0xff]
    %v344 = vld [vmem:[#allocation7 + $0x8] sm:$0xff]
    %v345 = vld [vmem:[#allocation7 + $0x10] sm:$0xff]
    %v346 = vld [vmem:[#allocation7 + $0x18] sm:$0xff]
    %v347 = vld [vmem:[#allocation7 + $0x20] sm:$0xff]
    %v348 = vld [vmem:[#allocation7 + $0x28] sm:$0xff]
    %v349 = vld [vmem:[#allocation7 + $0x30] sm:$0xff]
    %v350 = vld [vmem:[#allocation7 + $0x38] sm:$0xff]
    %v351 = vld [vmem:[#allocation7 + $0x40] sm:$0xff]
    %v352 = vld [vmem:[#allocation7 + $0x48] sm:$0xff]
    %v353 = vld [vmem:[#allocation7 + $0x50] sm:$0xff]
    %v354 = vld [vmem:[#allocation7 + $0x58] sm:$0xff]
    %v355 = vld [vmem:[#allocation7 + $0x60] sm:$0xff]
    %v356 = vld [vmem:[#allocation7 + $0x68] sm:$0xff]
    %v357 = vld [vmem:[#allocation7 + $0x70] sm:$0xff]
    %v358 = vld [vmem:[#allocation7 + $0x78] sm:$0xff]
    %v359 = vld [vmem:[%s4] sm:$0x1]
    %v361 = vlaneseq
    %v362 = vshrl.u32 %v361, 7
    %v363 = vsub.s32 0, %v362
    %v364 = vrot.slane %v359, %v363
    %366 = vmatprep.subr.mxu0 0.0
    %367 = vmatpush1.msra.mxu0 %v358
    %368 = vmatprep.subr.mxu0 0.0
    %369 = vmatpush1.msra.mxu0 %v357
    %370 = vmatprep.subr.mxu0 0.0
    %371 = vmatpush1.msra.mxu0 %v356
    %372 = vmatprep.subr.mxu0 0.0
    %373 = vmatpush1.msra.mxu0 %v355
    %374 = vmatprep.subr.mxu0 0.0
    %375 = vmatpush1.msra.mxu0 %v354
    %376 = vmatprep.subr.mxu0 0.0
    %377 = vmatpush1.msra.mxu0 %v353
    %378 = vmatprep.subr.mxu0 0.0
    %379 = vmatpush1.msra.mxu0 %v352
    %380 = vmatprep.subr.mxu0 0.0
    %381 = vmatpush1.msra.mxu0 %v351
    %382 = vmatprep.subr.mxu0 0.0
    %383 = vmatpush1.msra.mxu0 %v350
    %384 = vmatprep.subr.mxu0 0.0
    %385 = vmatpush1.msra.mxu0 %v349
    %386 = vmatprep.subr.mxu0 0.0
    %387 = vmatpush1.msra.mxu0 %v348
    %388 = vmatprep.subr.mxu0 0.0
    %389 = vmatpush1.msra.mxu0 %v347
    %390 = vmatprep.subr.mxu0 0.0
    %391 = vmatpush1.msra.mxu0 %v346
    %392 = vmatprep.subr.mxu0 0.0
    %393 = vmatpush1.msra.mxu0 %v345
    %394 = vmatprep.subr.mxu0 0.0
    %395 = vmatpush1.msra.mxu0 %v344
    %396 = vmatprep.subr.mxu0 0.0
    %397 = vmatpush1.msra.mxu0 %v343
    %398 = vmatprep.subr.mxu0 0.0
    %399 = vmatpush2.msra.mxu0 0.0
    %400 = vmatprep.subr.mxu0 0.0
    %401 = vmatpush2.msra.mxu0 0.0
    %402 = vmatprep.subr.mxu0 0.0
    %403 = vmatpush2.msra.mxu0 0.0
    %404 = vmatprep.subr.mxu0 0.0
    %405 = vmatpush2.msra.mxu0 0.0
    %406 = vmatprep.subr.mxu0 0.0
    %407 = vmatpush2.msra.mxu0 0.0
    %408 = vmatprep.subr.mxu0 0.0
    %409 = vmatpush2.msra.mxu0 0.0
    %410 = vmatprep.subr.mxu0 0.0
    %411 = vmatpush2.msra.mxu0 0.0
    %412 = vmatprep.subr.mxu0 0.0
    %413 = vmatpush2.msra.mxu0 0.0
    %414 = vmatprep.subr.mxu0 0.0
    %415 = vmatpush2.msra.mxu0 0.0
    %416 = vmatprep.subr.mxu0 0.0
    %417 = vmatpush2.msra.mxu0 0.0
    %418 = vmatprep.subr.mxu0 0.0
    %419 = vmatpush2.msra.mxu0 0.0
    %420 = vmatprep.subr.mxu0 0.0
    %421 = vmatpush2.msra.mxu0 0.0
    %422 = vmatprep.subr.mxu0 0.0
    %423 = vmatpush2.msra.mxu0 0.0
    %424 = vmatprep.subr.mxu0 0.0
    %425 = vmatpush2.msra.mxu0 0.0
    %426 = vmatprep.subr.mxu0 0.0
    %427 = vmatpush2.msra.mxu0 0.0
    %428 = vmatprep.subr.mxu0 0.0
    %429 = vmatpush2.msra.mxu0 0.0
    %430 = vmatprep.mubr.f32.mxu0 0.0
    %431 = vmatmul.mubr.f32.gmra.mxu0 %v327
    %v432 = vpop.f32.mrf.mxu0
    %v433 = vadd.f32 %v364, %v432
    %v434 = vpop.f32.mrf.mxu0
    %435 = vmatprep.mubr.f32.mxu0 0.0
    %436 = vmatmul.mubr.f32.gmra.mxu0 %v328
    %v437 = vpop.f32.mrf.mxu0
    %v438 = vadd.f32 %v364, %v437
    %v439 = vpop.f32.mrf.mxu0
    %440 = vmatprep.mubr.f32.mxu0 0.0
    %441 = vmatmul.mubr.f32.gmra.mxu0 %v329
    %v442 = vpop.f32.mrf.mxu0
    %v443 = vadd.f32 %v364, %v442
    %v444 = vpop.f32.mrf.mxu0
    %445 = vmatprep.mubr.f32.mxu0 0.0
    %446 = vmatmul.mubr.f32.gmra.mxu0 %v330
    %v447 = vpop.f32.mrf.mxu0
    %v448 = vadd.f32 %v364, %v447
    %v449 = vpop.f32.mrf.mxu0
    %450 = vmatprep.mubr.f32.mxu0 0.0
    %451 = vmatmul.mubr.f32.gmra.mxu0 %v331
    %v452 = vpop.f32.mrf.mxu0
    %v453 = vadd.f32 %v364, %v452
    %v454 = vpop.f32.mrf.mxu0
    %455 = vmatprep.mubr.f32.mxu0 0.0
    %456 = vmatmul.mubr.f32.gmra.mxu0 %v332
    %v457 = vpop.f32.mrf.mxu0
    %v458 = vadd.f32 %v364, %v457
    %v459 = vpop.f32.mrf.mxu0
    %460 = vmatprep.mubr.f32.mxu0 0.0
    %461 = vmatmul.mubr.f32.gmra.mxu0 %v333
    %v462 = vpop.f32.mrf.mxu0
    %v463 = vadd.f32 %v364, %v462
    %v464 = vpop.f32.mrf.mxu0
    %465 = vmatprep.mubr.f32.mxu0 0.0
    %466 = vmatmul.mubr.f32.gmra.mxu0 %v334
    %v467 = vpop.f32.mrf.mxu0
    %v468 = vadd.f32 %v364, %v467
    %v469 = vpop.f32.mrf.mxu0
    %470 = vmatprep.mubr.f32.mxu0 0.0
    %471 = vmatmul.mubr.f32.gmra.mxu0 %v335
    %v472 = vpop.f32.mrf.mxu0
    %v473 = vadd.f32 %v364, %v472
    %v474 = vpop.f32.mrf.mxu0
    %475 = vmatprep.mubr.f32.mxu0 0.0
    %476 = vmatmul.mubr.f32.gmra.mxu0 %v336
    %v477 = vpop.f32.mrf.mxu0
    %v478 = vadd.f32 %v364, %v477
    %v479 = vpop.f32.mrf.mxu0
    %480 = vmatprep.mubr.f32.mxu0 0.0
    %481 = vmatmul.mubr.f32.gmra.mxu0 %v337
    %v482 = vpop.f32.mrf.mxu0
    %v483 = vadd.f32 %v364, %v482
    %v484 = vpop.f32.mrf.mxu0
    %485 = vmatprep.mubr.f32.mxu0 0.0
    %486 = vmatmul.mubr.f32.gmra.mxu0 %v338
    %v487 = vpop.f32.mrf.mxu0
    %v488 = vadd.f32 %v364, %v487
    %v489 = vpop.f32.mrf.mxu0
    %490 = vmatprep.mubr.f32.mxu0 0.0
    %491 = vmatmul.mubr.f32.gmra.mxu0 %v339
    %v492 = vpop.f32.mrf.mxu0
    %v493 = vadd.f32 %v364, %v492
    %v494 = vpop.f32.mrf.mxu0
    %495 = vmatprep.mubr.f32.mxu0 0.0
    %496 = vmatmul.mubr.f32.gmra.mxu0 %v340
    %v497 = vpop.f32.mrf.mxu0
    %v498 = vadd.f32 %v364, %v497
    %v499 = vpop.f32.mrf.mxu0
    %500 = vmatprep.mubr.f32.mxu0 0.0
    %501 = vmatmul.mubr.f32.gmra.mxu0 %v341
    %v502 = vpop.f32.mrf.mxu0
    %v503 = vadd.f32 %v364, %v502
    %v504 = vpop.f32.mrf.mxu0
    %505 = vmatprep.mubr.f32.mxu0 0.0
    %506 = vmatmul.mubr.f32.gmra.mxu0 %v342
    %v507 = vpop.f32.mrf.mxu0
    %v508 = vadd.f32 %v364, %v507
    %v509 = vpop.f32.mrf.mxu0
    %510 = vdwg.mxu0
    %v511 = vld [vmem:[#allocation8] sm:$0xff]
    %v512 = vld [vmem:[#allocation8 + $0x8] sm:$0xff]
    %v513 = vld [vmem:[#allocation8 + $0x10] sm:$0xff]
    %v514 = vld [vmem:[#allocation8 + $0x18] sm:$0xff]
    %v515 = vld [vmem:[#allocation8 + $0x20] sm:$0xff]
    %v516 = vld [vmem:[#allocation8 + $0x28] sm:$0xff]
    %v517 = vld [vmem:[#allocation8 + $0x30] sm:$0xff]
    %v518 = vld [vmem:[#allocation8 + $0x38] sm:$0xff]
    %v519 = vld [vmem:[#allocation8 + $0x40] sm:$0xff]
    %v520 = vld [vmem:[#allocation8 + $0x48] sm:$0xff]
    %v521 = vld [vmem:[#allocation8 + $0x50] sm:$0xff]
    %v522 = vld [vmem:[#allocation8 + $0x58] sm:$0xff]
    %v523 = vld [vmem:[#allocation8 + $0x60] sm:$0xff]
    %v524 = vld [vmem:[#allocation8 + $0x68] sm:$0xff]
    %v525 = vld [vmem:[#allocation8 + $0x70] sm:$0xff]
    %v526 = vld [vmem:[#allocation8 + $0x78] sm:$0xff]
    %v527 = vmul.f32 %v433, %v511
    %v528 = vmul.f32 %v438, %v512
    %v529 = vmul.f32 %v443, %v513
    %v530 = vmul.f32 %v448, %v514
    %v531 = vmul.f32 %v453, %v515
    %v532 = vmul.f32 %v458, %v516
    %v533 = vmul.f32 %v463, %v517
    %v534 = vmul.f32 %v468, %v518
    %v535 = vmul.f32 %v473, %v519
    %v536 = vmul.f32 %v478, %v520
    %v537 = vmul.f32 %v483, %v521
    %v538 = vmul.f32 %v488, %v522
    %v539 = vmul.f32 %v493, %v523
    %v540 = vmul.f32 %v498, %v524
    %v541 = vmul.f32 %v503, %v525
    %v542 = vmul.f32 %v508, %v526
    %543 = vst [vmem:[#allocation10] sm:$0xff] %v527
    %544 = vst [vmem:[#allocation10 + $0x8] sm:$0xff] %v528
    %545 = vst [vmem:[#allocation10 + $0x10] sm:$0xff] %v529
    %546 = vst [vmem:[#allocation10 + $0x18] sm:$0xff] %v530
    %547 = vst [vmem:[#allocation10 + $0x20] sm:$0xff] %v531
    %548 = vst [vmem:[#allocation10 + $0x28] sm:$0xff] %v532
    %549 = vst [vmem:[#allocation10 + $0x30] sm:$0xff] %v533
    %550 = vst [vmem:[#allocation10 + $0x38] sm:$0xff] %v534
    %551 = vst [vmem:[#allocation10 + $0x40] sm:$0xff] %v535
    %552 = vst [vmem:[#allocation10 + $0x48] sm:$0xff] %v536
    %553 = vst [vmem:[#allocation10 + $0x50] sm:$0xff] %v537
    %554 = vst [vmem:[#allocation10 + $0x58] sm:$0xff] %v538
    %555 = vst [vmem:[#allocation10 + $0x60] sm:$0xff] %v539
    %556 = vst [vmem:[#allocation10 + $0x68] sm:$0xff] %v540
    %557 = vst [vmem:[#allocation10 + $0x70] sm:$0xff] %v541
    %558 = vst [vmem:[#allocation10 + $0x78] sm:$0xff] %v542
    // Predicated region
    $region42: #{tpu_custom_call.1} parent=1 // pred_check
      _
    $region43: #{tpu_custom_call.1} parent=1 // pred_check_branch
      %560 = sbr.rel (0) target = $region45
    $region44: #{tpu_custom_call.1} parent=1 // pred_region
      %s562 = ssub.s32 2048, 2048
      %563 = vsyncadd [#allocation4], %s562
      %s564 = sshll.u32 [#allocation10], 4
      %s565 = int_to_ptr.vmem [resolvable:$true] %s564
      %570 = dma.vmem_to_hbm [thread:$0]  %s565, 2048, %s6, [#allocation4], 128, 128, 8
    $region45: #{tpu_custom_call.1} parent=1 // pred_fallthru
      _
    // Predicated region
    $region46: #{tpu_custom_call.1} parent=1 // pred_check
      _
    $region47: #{tpu_custom_call.1} parent=1 // pred_check_branch
      %572 = sbr.rel (0) target = $region49
    $region48: #{tpu_custom_call.1} parent=1 // pred_region
      %573 = dma.done [#allocation4], 2048
    $region49: #{tpu_custom_call.1} parent=1 // pred_fallthru
      _
    %574 = vsyncpa [#allocation3], 1
    %575 = vsyncpa [#allocation6], 1
    %576 = vsyncpa [#allocation9], 1
    %577 = vsyncpa [#allocation4], 1

</llo_original>
